<compile_context>
chip_gen: v6e
topology: v6e:2x2x1
jax: 0.10.0
libtpu: 0.0.40
codegen_flags: <defaults>
</compile_context>

<pallas_src>
import jax
import jax.numpy as jnp
from jax.experimental import pallas as pl
from jax.experimental.pallas import tpu as pltpu


# ---------------------------------------------------------------------------
# Materialized-copy kernel: one HBM->HBM DMA for the whole (already squeezed) array.
# ---------------------------------------------------------------------------
def _dma_copy_kernel(x_hbm_ref, o_hbm_ref, sem):
    cp = pltpu.make_async_copy(x_hbm_ref, o_hbm_ref, sem)
    cp.start()
    cp.wait()


def _materialized_copy(x: jax.Array) -> jax.Array:
    """Identity copy of `x` via a single async DMA (no VMEM round trip)."""
    itemsize = jnp.dtype(x.dtype).itemsize
    return pl.pallas_call(
        _dma_copy_kernel,
        out_shape=jax.ShapeDtypeStruct(x.shape, x.dtype),
        in_specs=[pl.BlockSpec(memory_space=pl.ANY)],    # leave input in HBM
        out_specs=pl.BlockSpec(memory_space=pl.ANY),     # output written by the DMA
        scratch_shapes=[pltpu.SemaphoreType.DMA],        # completion semaphore
        cost_estimate=pl.CostEstimate(
            flops=0,
            transcendentals=0,
            bytes_accessed=2 * x.size * itemsize,        # read + write, exact bytes
        ),
    )(x)


# ---------------------------------------------------------------------------
# Squeeze forward (torch semantics).
# ---------------------------------------------------------------------------
def squeeze_pallas(x: jax.Array, dim: int = -1, *, materialize: bool = False) -> jax.Array:
    """Equivalent of torch.Tensor.squeeze(dim=dim).

    Default path is metadata-only (free).  Set materialize=True to force a fresh
    HBM allocation filled by the Pallas DMA-copy kernel.
    """
    ndim = x.ndim
    if ndim == 0:
        return x
    axis = dim if dim >= 0 else dim + ndim

    # torch semantics: only drop the axis if its size is 1; otherwise it is a no-op.
    if x.shape[axis] != 1:
        return x  # fastest copy is no copy

    out_shape = x.shape[:axis] + x.shape[axis + 1:]
    y = x.reshape(out_shape)          # metadata-only squeeze: 0 bytes of HBM traffic

    if materialize and x.size > 0:    # optional explicit copy through the Pallas kernel
        y = _materialized_copy(y)
    return y


if __name__ == "__main__":
    key = jax.random.PRNGKey(0)

    # Small NCHW-style input with a trailing size-1 dim (the one being squeezed).
    B, C, S = 2, 4, 16
    x = jax.random.normal(key, (B, C, S, 1), dtype=jnp.float32)
    ref = jnp.squeeze(x, axis=-1)

    # Default (metadata-only) path.
    y = jax.block_until_ready(squeeze_pallas(x, dim=-1))
    assert y.shape == (B, C, S) and y.dtype == x.dtype
    assert bool(jnp.allclose(y, ref)), "value mismatch (metadata path)"

    # Materialized path: exercises the Pallas HBM->HBM DMA copy kernel on TPU.
    ym = jax.block_until_ready(squeeze_pallas(x, dim=-1, materialize=True))
    assert ym.shape == (B, C, S) and ym.dtype == x.dtype
    assert bool(jnp.allclose(ym, ref)), "value mismatch (DMA copy path)"

    # Squeeze a middle size-1 axis (ragged element count 2*16*8=256 is fine: no padding).
    x2 = jax.random.normal(key, (B, 1, S, 8), dtype=jnp.float32)
    y2 = jax.block_until_ready(squeeze_pallas(x2, dim=1, materialize=True))
    assert y2.shape == (B, S, 8)
    assert bool(jnp.allclose(y2, jnp.squeeze(x2, axis=1)))

    # No-op case (dim size != 1 -> unchanged), as torch does.
    z = jax.block_until_ready(squeeze_pallas(ref, dim=0))  # dim 0 has size 2
    assert z.shape == ref.shape
    assert bool(jnp.allclose(z, ref))

    # bf16 path through the DMA kernel (dtype-agnostic data move).
    xb = jax.random.normal(key, (B, C, S, 1), dtype=jnp.bfloat16)
    yb = jax.block_until_ready(squeeze_pallas(xb, dim=-1, materialize=True))
    assert yb.shape == (B, C, S) and yb.dtype == jnp.bfloat16
    assert bool(jnp.allclose(yb.astype(jnp.float32),
                             jnp.squeeze(xb, axis=-1).astype(jnp.float32)))

    print("KERNEL_OK")
</pallas_src>

<mosaic_0001>
module attributes {stable_mosaic.version = 11 : i64} {
  func.func @_dma_copy_kernel(%arg0: memref<2x4x16xf32, #tpu.memory_space<any>>, %arg1: memref<2x4x16xf32, #tpu.memory_space<any>>, %arg2: memref<!tpu.dma_semaphore, #tpu.memory_space<semaphore_mem>>) attributes {dimension_semantics = [], scalar_prefetch = 0 : i64, scratch_operands = 1 : i64, tpu.core_type = #tpu.core_type<tc>} {
    tpu.enqueue_dma source(%arg0 : memref<2x4x16xf32, #tpu.memory_space<any>>) target(%arg1 : memref<2x4x16xf32, #tpu.memory_space<any>>) target_semaphore(%arg2 : memref<!tpu.dma_semaphore, #tpu.memory_space<semaphore_mem>>)
    tpu.wait_dma2 semaphore(%arg2 : memref<!tpu.dma_semaphore, #tpu.memory_space<semaphore_mem>>) src(%arg0 : memref<2x4x16xf32, #tpu.memory_space<any>>) dst(%arg1 : memref<2x4x16xf32, #tpu.memory_space<any>>)
    return
  }
}

</mosaic_0001>

<llo_original>
// kernel: tpu_custom_call.1
$region0: #{tpu_custom_call.1}
  #allocation0 [shape = 'u32[]', space=smem, size = 0x4, offset = 0x4, fixed_abs, tag = 'smem constant byte address 0x4 - core index']
  #allocation1 [shape = 'u32[144,128]{1,0:T(1,128)}', space=vmem, size = 0x12000, scoped, tag = 'internal scratch']
  #allocation2 [shape = 's32[1]{0}', space=sflag, size = 0x4, scoped, tag = 'scratch operand']
  #allocation3 [shape = 's32[]', space=sflag, size = 0x4, offset = 0, fixed_abs, tag = 'sflag constant byte address 0x0 - dummy sync flag']
  #allocation4 [shape = 'u32[0]{0}', space=smem, size = 0, offset = 0, fixed_abs, tag = 'smem constant byte address 0x0 - null']
  %s0 = inlined_call_operand.hbm [shape: f32[2,4,16], index: 0, kind: input, shape index: {}]
  %s1 = inlined_call_operand.hbm [shape: f32[2,4,16], index: 1, kind: output, shape index: {}]
  %s2 = sld [smem:[#allocation0]]
  $region2: #{tpu_custom_call.1} parent=0
    _
  %s4 = ssub.s32 1, %s2
  %s5 = scalar_select 0, %s4, %s2
  %s7 = sshll.u32 1, 14
  %s8 = sxor.u32 4294967295, %s7
  %12 = dma.general %s0, 128, %s1, [#allocation2], 131072, [#allocation4], 0, 0
  %s13 = smul.u32 2, 4
  %s14 = smul.u32 %s13, 1
  %s15 = sshll.u32 %s14, 4
  %16 = dma.done [#allocation2], %s15
  %17 = vsyncmov [#allocation2]
  %s18 = vpop.sfrf %17
  %p19 = scmp.eq.s32.totalorder %s18, 0
  %p20 = pneg %p19
  %22 = shalt.err (%p20)

</llo_original>
